<compile_context>
chip_gen: v6e
topology: v6e:2x2x1
jax: 0.10.0
libtpu: 0.0.40
codegen_flags: <defaults>
</compile_context>

<pallas_src>
import jax
import jax.numpy as jnp
from jax.experimental import pallas as pl
from jax.experimental.pallas import tpu as pltpu

IN_F = 3
HID = 10
OUT_F = 1


def mlp_kernel(x_ref, w1_ref, b1_ref, w2_ref, b2_ref, o_ref):
    # x_ref: (IN_F, TILE_B) in VMEM — features on sublanes, batch on lanes.
    # w1_ref: (IN_F*HID,), b1_ref: (HID,), w2_ref: (HID,), b2_ref: (1,) in SMEM.
    x = x_ref[...]                      # (3, TB) f32
    x0 = x[0:1, :]                      # (1, TB)
    x1 = x[1:2, :]
    x2 = x[2:3, :]

    # Output accumulator, initialized with the output bias (hoisted once).
    y = jnp.full((1, x.shape[1]), b2_ref[0], dtype=jnp.float32)

    # Unrolled over the 10 hidden units: each is a scalar-broadcast MAC chain
    # on the VPU plus one EUP tanh — no MXU involvement.
    for j in range(HID):
        h = (x0 * w1_ref[0 * HID + j]
             + x1 * w1_ref[1 * HID + j]
             + x2 * w1_ref[2 * HID + j]
             + b1_ref[j])
        y = y + jnp.tanh(h) * w2_ref[j]

    o_ref[...] = y.astype(o_ref.dtype)


def mlp_forward(x, w1, b1, w2, b2, *, tile_b=128):
    """x: (B, 3) f32; w1: (3, 10) (in, out); b1: (10,); w2: (10, 1); b2: (1,).

    Returns (B, 1), matching PyTorch nn.Linear semantics y = x @ W^T + b
    (weights are already stored pre-transposed as (in, out))."""
    B = x.shape[0]
    n_tiles = pl.cdiv(B, tile_b)
    b_pad = n_tiles * tile_b

    # Batch-on-lanes layout, zero-padded to a multiple of the lane tile.
    x_t = jnp.zeros((IN_F, b_pad), x.dtype).at[:, :B].set(x.T)

    # Flatten params to 1-D for SMEM (avoids 2-D SMEM padding); row-major so
    # w1f[k*HID + j] == w1[k, j].
    w1f = w1.reshape(-1)
    b1f = b1.reshape(-1)
    w2f = w2.reshape(-1)
    b2f = b2.reshape(-1)

    smem = pl.BlockSpec(memory_space=pltpu.MemorySpace.SMEM)

    out = pl.pallas_call(
        mlp_kernel,
        out_shape=jax.ShapeDtypeStruct((OUT_F, b_pad), x.dtype),
        grid=(n_tiles,),
        in_specs=[
            pl.BlockSpec((IN_F, tile_b), lambda i: (0, i)),   # x tile
            smem, smem, smem, smem,                           # params in SMEM
        ],
        out_specs=pl.BlockSpec((OUT_F, tile_b), lambda i: (0, i)),
        compiler_params=pltpu.CompilerParams(
            dimension_semantics=("parallel",)),
    )(x_t, w1f, b1f, w2f, b2f)

    # Back to PyTorch layout (B, 1), dropping batch padding.
    return out[:, :B].T


def init_params(key):
    """Deterministic init mimicking nn.Linear's U(-1/sqrt(fan_in), 1/sqrt(fan_in))."""
    k1, k2, k3, k4 = jax.random.split(key, 4)
    lim1 = 1.0 / jnp.sqrt(3.0)
    lim2 = 1.0 / jnp.sqrt(10.0)
    w1 = jax.random.uniform(k1, (IN_F, HID), jnp.float32, -lim1, lim1)  # (in, out)
    b1 = jax.random.uniform(k2, (HID,), jnp.float32, -lim1, lim1)
    w2 = jax.random.uniform(k3, (HID, OUT_F), jnp.float32, -lim2, lim2)
    b2 = jax.random.uniform(k4, (OUT_F,), jnp.float32, -lim2, lim2)
    return w1, b1, w2, b2


if __name__ == "__main__":
    key = jax.random.PRNGKey(0)
    kx, kp = jax.random.split(key)

    # Small batch (non-multiple of the lane tile to exercise padding).
    B = 300
    x = jax.random.normal(kx, (B, IN_F), jnp.float32)
    w1, b1, w2, b2 = init_params(kp)

    out = mlp_forward(x, w1, b1, w2, b2)
    out = jax.block_until_ready(out)

    # Pure-JAX reference for sanity check.
    ref = jnp.tanh(x @ w1 + b1) @ w2 + b2
    assert out.shape == (B, OUT_F)
    assert jnp.allclose(out, ref, atol=1e-5, rtol=1e-5)

    print("KERNEL_OK")
</pallas_src>

<mosaic_0001>
module attributes {stable_mosaic.version = 11 : i64} {
  func.func @mlp_kernel(%arg0: i32, %arg1: memref<3x128xf32, #tpu.memory_space<vmem>>, %arg2: memref<30xf32, #tpu.memory_space<smem>>, %arg3: memref<10xf32, #tpu.memory_space<smem>>, %arg4: memref<10xf32, #tpu.memory_space<smem>>, %arg5: memref<1xf32, #tpu.memory_space<smem>>, %arg6: memref<1x128xf32, #tpu.memory_space<vmem>>) attributes {dimension_semantics = [#tpu.dimension_semantics<parallel>], iteration_bounds = array<i64: 3>, scalar_prefetch = 0 : i64, scratch_operands = 0 : i64, tpu.core_type = #tpu.core_type<tc>, window_params = [{transform_indices = @transform_0, window_bounds = array<i64: 3, 128>}, {transform_indices = @transform_1, window_bounds = array<i64: 30>}, {transform_indices = @transform_2, window_bounds = array<i64: 10>}, {transform_indices = @transform_3, window_bounds = array<i64: 10>}, {transform_indices = @transform_4, window_bounds = array<i64: 1>}, {transform_indices = @transform_5, window_bounds = array<i64: 1, 128>}]} {
    %c0 = arith.constant 0 : index
    %c0_0 = arith.constant 0 : index
    %0 = vector.load %arg1[%c0, %c0_0] : memref<3x128xf32, #tpu.memory_space<vmem>>, vector<3x128xf32>
    %1 = vector.extract_strided_slice %0 {offsets = [0, 0], sizes = [1, 128], strides = [1, 1]} : vector<3x128xf32> to vector<1x128xf32>
    %2 = vector.extract_strided_slice %0 {offsets = [1, 0], sizes = [1, 128], strides = [1, 1]} : vector<3x128xf32> to vector<1x128xf32>
    %3 = vector.extract_strided_slice %0 {offsets = [2, 0], sizes = [1, 128], strides = [1, 1]} : vector<3x128xf32> to vector<1x128xf32>
    %c0_1 = arith.constant 0 : index
    %4 = memref.load %arg5[%c0_1] : memref<1xf32, #tpu.memory_space<smem>>
    %5 = vector.broadcast %4 : f32 to vector<1x128xf32>
    %c0_2 = arith.constant 0 : index
    %6 = memref.load %arg2[%c0_2] : memref<30xf32, #tpu.memory_space<smem>>
    %7 = vector.broadcast %6 : f32 to vector<1x128xf32>
    %8 = arith.mulf %1, %7 : vector<1x128xf32>
    %c10 = arith.constant 10 : index
    %9 = memref.load %arg2[%c10] : memref<30xf32, #tpu.memory_space<smem>>
    %10 = vector.broadcast %9 : f32 to vector<1x128xf32>
    %11 = arith.mulf %2, %10 : vector<1x128xf32>
    %12 = arith.addf %8, %11 : vector<1x128xf32>
    %c20 = arith.constant 20 : index
    %13 = memref.load %arg2[%c20] : memref<30xf32, #tpu.memory_space<smem>>
    %14 = vector.broadcast %13 : f32 to vector<1x128xf32>
    %15 = arith.mulf %3, %14 : vector<1x128xf32>
    %16 = arith.addf %12, %15 : vector<1x128xf32>
    %c0_3 = arith.constant 0 : index
    %17 = memref.load %arg3[%c0_3] : memref<10xf32, #tpu.memory_space<smem>>
    %18 = vector.broadcast %17 : f32 to vector<1x128xf32>
    %19 = arith.addf %16, %18 : vector<1x128xf32>
    %20 = math.tanh %19 : vector<1x128xf32>
    %c0_4 = arith.constant 0 : index
    %21 = memref.load %arg4[%c0_4] : memref<10xf32, #tpu.memory_space<smem>>
    %22 = vector.broadcast %21 : f32 to vector<1x128xf32>
    %23 = arith.mulf %20, %22 : vector<1x128xf32>
    %24 = arith.addf %5, %23 : vector<1x128xf32>
    %c1 = arith.constant 1 : index
    %25 = memref.load %arg2[%c1] : memref<30xf32, #tpu.memory_space<smem>>
    %26 = vector.broadcast %25 : f32 to vector<1x128xf32>
    %27 = arith.mulf %1, %26 : vector<1x128xf32>
    %c11 = arith.constant 11 : index
    %28 = memref.load %arg2[%c11] : memref<30xf32, #tpu.memory_space<smem>>
    %29 = vector.broadcast %28 : f32 to vector<1x128xf32>
    %30 = arith.mulf %2, %29 : vector<1x128xf32>
    %31 = arith.addf %27, %30 : vector<1x128xf32>
    %c21 = arith.constant 21 : index
    %32 = memref.load %arg2[%c21] : memref<30xf32, #tpu.memory_space<smem>>
    %33 = vector.broadcast %32 : f32 to vector<1x128xf32>
    %34 = arith.mulf %3, %33 : vector<1x128xf32>
    %35 = arith.addf %31, %34 : vector<1x128xf32>
    %c1_5 = arith.constant 1 : index
    %36 = memref.load %arg3[%c1_5] : memref<10xf32, #tpu.memory_space<smem>>
    %37 = vector.broadcast %36 : f32 to vector<1x128xf32>
    %38 = arith.addf %35, %37 : vector<1x128xf32>
    %39 = math.tanh %38 : vector<1x128xf32>
    %c1_6 = arith.constant 1 : index
    %40 = memref.load %arg4[%c1_6] : memref<10xf32, #tpu.memory_space<smem>>
    %41 = vector.broadcast %40 : f32 to vector<1x128xf32>
    %42 = arith.mulf %39, %41 : vector<1x128xf32>
    %43 = arith.addf %24, %42 : vector<1x128xf32>
    %c2 = arith.constant 2 : index
    %44 = memref.load %arg2[%c2] : memref<30xf32, #tpu.memory_space<smem>>
    %45 = vector.broadcast %44 : f32 to vector<1x128xf32>
    %46 = arith.mulf %1, %45 : vector<1x128xf32>
    %c12 = arith.constant 12 : index
    %47 = memref.load %arg2[%c12] : memref<30xf32, #tpu.memory_space<smem>>
    %48 = vector.broadcast %47 : f32 to vector<1x128xf32>
    %49 = arith.mulf %2, %48 : vector<1x128xf32>
    %50 = arith.addf %46, %49 : vector<1x128xf32>
    %c22 = arith.constant 22 : index
    %51 = memref.load %arg2[%c22] : memref<30xf32, #tpu.memory_space<smem>>
    %52 = vector.broadcast %51 : f32 to vector<1x128xf32>
    %53 = arith.mulf %3, %52 : vector<1x128xf32>
    %54 = arith.addf %50, %53 : vector<1x128xf32>
    %c2_7 = arith.constant 2 : index
    %55 = memref.load %arg3[%c2_7] : memref<10xf32, #tpu.memory_space<smem>>
    %56 = vector.broadcast %55 : f32 to vector<1x128xf32>
    %57 = arith.addf %54, %56 : vector<1x128xf32>
    %58 = math.tanh %57 : vector<1x128xf32>
    %c2_8 = arith.constant 2 : index
    %59 = memref.load %arg4[%c2_8] : memref<10xf32, #tpu.memory_space<smem>>
    %60 = vector.broadcast %59 : f32 to vector<1x128xf32>
    %61 = arith.mulf %58, %60 : vector<1x128xf32>
    %62 = arith.addf %43, %61 : vector<1x128xf32>
    %c3 = arith.constant 3 : index
    %63 = memref.load %arg2[%c3] : memref<30xf32, #tpu.memory_space<smem>>
    %64 = vector.broadcast %63 : f32 to vector<1x128xf32>
    %65 = arith.mulf %1, %64 : vector<1x128xf32>
    %c13 = arith.constant 13 : index
    %66 = memref.load %arg2[%c13] : memref<30xf32, #tpu.memory_space<smem>>
    %67 = vector.broadcast %66 : f32 to vector<1x128xf32>
    %68 = arith.mulf %2, %67 : vector<1x128xf32>
    %69 = arith.addf %65, %68 : vector<1x128xf32>
    %c23 = arith.constant 23 : index
    %70 = memref.load %arg2[%c23] : memref<30xf32, #tpu.memory_space<smem>>
    %71 = vector.broadcast %70 : f32 to vector<1x128xf32>
    %72 = arith.mulf %3, %71 : vector<1x128xf32>
    %73 = arith.addf %69, %72 : vector<1x128xf32>
    %c3_9 = arith.constant 3 : index
    %74 = memref.load %arg3[%c3_9] : memref<10xf32, #tpu.memory_space<smem>>
    %75 = vector.broadcast %74 : f32 to vector<1x128xf32>
    %76 = arith.addf %73, %75 : vector<1x128xf32>
    %77 = math.tanh %76 : vector<1x128xf32>
    %c3_10 = arith.constant 3 : index
    %78 = memref.load %arg4[%c3_10] : memref<10xf32, #tpu.memory_space<smem>>
    %79 = vector.broadcast %78 : f32 to vector<1x128xf32>
    %80 = arith.mulf %77, %79 : vector<1x128xf32>
    %81 = arith.addf %62, %80 : vector<1x128xf32>
    %c4 = arith.constant 4 : index
    %82 = memref.load %arg2[%c4] : memref<30xf32, #tpu.memory_space<smem>>
    %83 = vector.broadcast %82 : f32 to vector<1x128xf32>
    %84 = arith.mulf %1, %83 : vector<1x128xf32>
    %c14 = arith.constant 14 : index
    %85 = memref.load %arg2[%c14] : memref<30xf32, #tpu.memory_space<smem>>
    %86 = vector.broadcast %85 : f32 to vector<1x128xf32>
    %87 = arith.mulf %2, %86 : vector<1x128xf32>
    %88 = arith.addf %84, %87 : vector<1x128xf32>
    %c24 = arith.constant 24 : index
    %89 = memref.load %arg2[%c24] : memref<30xf32, #tpu.memory_space<smem>>
    %90 = vector.broadcast %89 : f32 to vector<1x128xf32>
    %91 = arith.mulf %3, %90 : vector<1x128xf32>
    %92 = arith.addf %88, %91 : vector<1x128xf32>
    %c4_11 = arith.constant 4 : index
    %93 = memref.load %arg3[%c4_11] : memref<10xf32, #tpu.memory_space<smem>>
    %94 = vector.broadcast %93 : f32 to vector<1x128xf32>
    %95 = arith.addf %92, %94 : vector<1x128xf32>
    %96 = math.tanh %95 : vector<1x128xf32>
    %c4_12 = arith.constant 4 : index
    %97 = memref.load %arg4[%c4_12] : memref<10xf32, #tpu.memory_space<smem>>
    %98 = vector.broadcast %97 : f32 to vector<1x128xf32>
    %99 = arith.mulf %96, %98 : vector<1x128xf32>
    %100 = arith.addf %81, %99 : vector<1x128xf32>
    %c5 = arith.constant 5 : index
    %101 = memref.load %arg2[%c5] : memref<30xf32, #tpu.memory_space<smem>>
    %102 = vector.broadcast %101 : f32 to vector<1x128xf32>
    %103 = arith.mulf %1, %102 : vector<1x128xf32>
    %c15 = arith.constant 15 : index
    %104 = memref.load %arg2[%c15] : memref<30xf32, #tpu.memory_space<smem>>
    %105 = vector.broadcast %104 : f32 to vector<1x128xf32>
    %106 = arith.mulf %2, %105 : vector<1x128xf32>
    %107 = arith.addf %103, %106 : vector<1x128xf32>
    %c25 = arith.constant 25 : index
    %108 = memref.load %arg2[%c25] : memref<30xf32, #tpu.memory_space<smem>>
    %109 = vector.broadcast %108 : f32 to vector<1x128xf32>
    %110 = arith.mulf %3, %109 : vector<1x128xf32>
    %111 = arith.addf %107, %110 : vector<1x128xf32>
    %c5_13 = arith.constant 5 : index
    %112 = memref.load %arg3[%c5_13] : memref<10xf32, #tpu.memory_space<smem>>
    %113 = vector.broadcast %112 : f32 to vector<1x128xf32>
    %114 = arith.addf %111, %113 : vector<1x128xf32>
    %115 = math.tanh %114 : vector<1x128xf32>
    %c5_14 = arith.constant 5 : index
    %116 = memref.load %arg4[%c5_14] : memref<10xf32, #tpu.memory_space<smem>>
    %117 = vector.broadcast %116 : f32 to vector<1x128xf32>
    %118 = arith.mulf %115, %117 : vector<1x128xf32>
    %119 = arith.addf %100, %118 : vector<1x128xf32>
    %c6 = arith.constant 6 : index
    %120 = memref.load %arg2[%c6] : memref<30xf32, #tpu.memory_space<smem>>
    %121 = vector.broadcast %120 : f32 to vector<1x128xf32>
    %122 = arith.mulf %1, %121 : vector<1x128xf32>
    %c16 = arith.constant 16 : index
    %123 = memref.load %arg2[%c16] : memref<30xf32, #tpu.memory_space<smem>>
    %124 = vector.broadcast %123 : f32 to vector<1x128xf32>
    %125 = arith.mulf %2, %124 : vector<1x128xf32>
    %126 = arith.addf %122, %125 : vector<1x128xf32>
    %c26 = arith.constant 26 : index
    %127 = memref.load %arg2[%c26] : memref<30xf32, #tpu.memory_space<smem>>
    %128 = vector.broadcast %127 : f32 to vector<1x128xf32>
    %129 = arith.mulf %3, %128 : vector<1x128xf32>
    %130 = arith.addf %126, %129 : vector<1x128xf32>
    %c6_15 = arith.constant 6 : index
    %131 = memref.load %arg3[%c6_15] : memref<10xf32, #tpu.memory_space<smem>>
    %132 = vector.broadcast %131 : f32 to vector<1x128xf32>
    %133 = arith.addf %130, %132 : vector<1x128xf32>
    %134 = math.tanh %133 : vector<1x128xf32>
    %c6_16 = arith.constant 6 : index
    %135 = memref.load %arg4[%c6_16] : memref<10xf32, #tpu.memory_space<smem>>
    %136 = vector.broadcast %135 : f32 to vector<1x128xf32>
    %137 = arith.mulf %134, %136 : vector<1x128xf32>
    %138 = arith.addf %119, %137 : vector<1x128xf32>
    %c7 = arith.constant 7 : index
    %139 = memref.load %arg2[%c7] : memref<30xf32, #tpu.memory_space<smem>>
    %140 = vector.broadcast %139 : f32 to vector<1x128xf32>
    %141 = arith.mulf %1, %140 : vector<1x128xf32>
    %c17 = arith.constant 17 : index
    %142 = memref.load %arg2[%c17] : memref<30xf32, #tpu.memory_space<smem>>
    %143 = vector.broadcast %142 : f32 to vector<1x128xf32>
    %144 = arith.mulf %2, %143 : vector<1x128xf32>
    %145 = arith.addf %141, %144 : vector<1x128xf32>
    %c27 = arith.constant 27 : index
    %146 = memref.load %arg2[%c27] : memref<30xf32, #tpu.memory_space<smem>>
    %147 = vector.broadcast %146 : f32 to vector<1x128xf32>
    %148 = arith.mulf %3, %147 : vector<1x128xf32>
    %149 = arith.addf %145, %148 : vector<1x128xf32>
    %c7_17 = arith.constant 7 : index
    %150 = memref.load %arg3[%c7_17] : memref<10xf32, #tpu.memory_space<smem>>
    %151 = vector.broadcast %150 : f32 to vector<1x128xf32>
    %152 = arith.addf %149, %151 : vector<1x128xf32>
    %153 = math.tanh %152 : vector<1x128xf32>
    %c7_18 = arith.constant 7 : index
    %154 = memref.load %arg4[%c7_18] : memref<10xf32, #tpu.memory_space<smem>>
    %155 = vector.broadcast %154 : f32 to vector<1x128xf32>
    %156 = arith.mulf %153, %155 : vector<1x128xf32>
    %157 = arith.addf %138, %156 : vector<1x128xf32>
    %c8 = arith.constant 8 : index
    %158 = memref.load %arg2[%c8] : memref<30xf32, #tpu.memory_space<smem>>
    %159 = vector.broadcast %158 : f32 to vector<1x128xf32>
    %160 = arith.mulf %1, %159 : vector<1x128xf32>
    %c18 = arith.constant 18 : index
    %161 = memref.load %arg2[%c18] : memref<30xf32, #tpu.memory_space<smem>>
    %162 = vector.broadcast %161 : f32 to vector<1x128xf32>
    %163 = arith.mulf %2, %162 : vector<1x128xf32>
    %164 = arith.addf %160, %163 : vector<1x128xf32>
    %c28 = arith.constant 28 : index
    %165 = memref.load %arg2[%c28] : memref<30xf32, #tpu.memory_space<smem>>
    %166 = vector.broadcast %165 : f32 to vector<1x128xf32>
    %167 = arith.mulf %3, %166 : vector<1x128xf32>
    %168 = arith.addf %164, %167 : vector<1x128xf32>
    %c8_19 = arith.constant 8 : index
    %169 = memref.load %arg3[%c8_19] : memref<10xf32, #tpu.memory_space<smem>>
    %170 = vector.broadcast %169 : f32 to vector<1x128xf32>
    %171 = arith.addf %168, %170 : vector<1x128xf32>
    %172 = math.tanh %171 : vector<1x128xf32>
    %c8_20 = arith.constant 8 : index
    %173 = memref.load %arg4[%c8_20] : memref<10xf32, #tpu.memory_space<smem>>
    %174 = vector.broadcast %173 : f32 to vector<1x128xf32>
    %175 = arith.mulf %172, %174 : vector<1x128xf32>
    %176 = arith.addf %157, %175 : vector<1x128xf32>
    %c9 = arith.constant 9 : index
    %177 = memref.load %arg2[%c9] : memref<30xf32, #tpu.memory_space<smem>>
    %178 = vector.broadcast %177 : f32 to vector<1x128xf32>
    %179 = arith.mulf %1, %178 : vector<1x128xf32>
    %c19 = arith.constant 19 : index
    %180 = memref.load %arg2[%c19] : memref<30xf32, #tpu.memory_space<smem>>
    %181 = vector.broadcast %180 : f32 to vector<1x128xf32>
    %182 = arith.mulf %2, %181 : vector<1x128xf32>
    %183 = arith.addf %179, %182 : vector<1x128xf32>
    %c29 = arith.constant 29 : index
    %184 = memref.load %arg2[%c29] : memref<30xf32, #tpu.memory_space<smem>>
    %185 = vector.broadcast %184 : f32 to vector<1x128xf32>
    %186 = arith.mulf %3, %185 : vector<1x128xf32>
    %187 = arith.addf %183, %186 : vector<1x128xf32>
    %c9_21 = arith.constant 9 : index
    %188 = memref.load %arg3[%c9_21] : memref<10xf32, #tpu.memory_space<smem>>
    %189 = vector.broadcast %188 : f32 to vector<1x128xf32>
    %190 = arith.addf %187, %189 : vector<1x128xf32>
    %191 = math.tanh %190 : vector<1x128xf32>
    %c9_22 = arith.constant 9 : index
    %192 = memref.load %arg4[%c9_22] : memref<10xf32, #tpu.memory_space<smem>>
    %193 = vector.broadcast %192 : f32 to vector<1x128xf32>
    %194 = arith.mulf %191, %193 : vector<1x128xf32>
    %195 = arith.addf %176, %194 : vector<1x128xf32>
    %c0_23 = arith.constant 0 : index
    %c0_24 = arith.constant 0 : index
    %196 = vector.load %arg6[%c0_23, %c0_24] : memref<1x128xf32, #tpu.memory_space<vmem>>, vector<1x128xf32>
    tpu.vector_store %arg6[%c0_23, %c0_24], %195 {strides = array<i32>} : memref<1x128xf32, #tpu.memory_space<vmem>>, vector<1x128xf32>,
    return
  }
  func.func @transform_0(%arg0: i32) -> (i32, i32) {
    %c0_i32 = arith.constant 0 : i32
    %c0_i32_0 = arith.constant 0 : i32
    return %c0_i32, %arg0 : i32, i32
  }
  func.func @transform_1(%arg0: i32) -> i32 {
    %c0_i32 = arith.constant 0 : i32
    %c0_i32_0 = arith.constant 0 : i32
    return %c0_i32 : i32
  }
  func.func @transform_2(%arg0: i32) -> i32 {
    %c0_i32 = arith.constant 0 : i32
    %c0_i32_0 = arith.constant 0 : i32
    return %c0_i32 : i32
  }
  func.func @transform_3(%arg0: i32) -> i32 {
    %c0_i32 = arith.constant 0 : i32
    %c0_i32_0 = arith.constant 0 : i32
    return %c0_i32 : i32
  }
  func.func @transform_4(%arg0: i32) -> i32 {
    %c0_i32 = arith.constant 0 : i32
    %c0_i32_0 = arith.constant 0 : i32
    return %c0_i32 : i32
  }
  func.func @transform_5(%arg0: i32) -> (i32, i32) {
    %c0_i32 = arith.constant 0 : i32
    %c0_i32_0 = arith.constant 0 : i32
    return %c0_i32, %arg0 : i32, i32
  }
}

</mosaic_0001>

<llo_original>
// kernel: tpu_custom_call.1
$region0: #{tpu_custom_call.1}
  #allocation0 [shape = 'u32[]', space=smem, size = 0x4, offset = 0x4, fixed_abs, tag = 'smem constant byte address 0x4 - core index']
  #allocation1 [shape = 'u32[144,128]{1,0:T(1,128)}', space=vmem, size = 0x12000, scoped, tag = 'internal scratch']
  #allocation2 [shape = 'f32[1]{0:T(128)S(6)}', space=smem, size = 0x200, scoped, tag = 'scoped memory for tpu_custom_call.1']
  %s0 = inlined_call_operand.hbm [shape: f32[3,384], index: 0, kind: input, shape index: {}]
  %s1 = inlined_call_operand.vmem [shape: f32[30], index: 1, kind: input, shape index: {}]
  %s2 = inlined_call_operand.vmem [shape: f32[10], index: 2, kind: input, shape index: {}]
  %s3 = inlined_call_operand.vmem [shape: f32[10], index: 3, kind: input, shape index: {}]
  %s4 = inlined_call_operand.<no memory space> [shape: f32[1], index: 4, kind: input, shape index: {}]
  %s5 = inlined_call_operand.hbm [shape: f32[1,384], index: 5, kind: output, shape index: {}]
  %s6 = sld [smem:[#allocation0]]
  $region69: #{tpu_custom_call.1} parent=0
    _
  %s8 = ssub.s32 1, %s6
  %s9 = scalar_select 0, %s8, %s6
  %10 = sst [smem:[#allocation2]] %s4
  $region1: #{tpu_custom_call.1} parent=0
    #allocation3 [shape = 'u8[4096]{0}', space=vmem, size = 0x1000, scoped, tag = 'input window, operand 0']
    #allocation4 [shape = 's32[2]{0}', space=sflag, size = 0x8, scoped, tag = 'scoped memory for tpu_custom_call.1']
    #allocation5 [shape = 's32[2]{0}', space=sflag, size = 0x8, scoped, tag = 'scoped memory for tpu_custom_call.1']
    #allocation6 [shape = 's32[2]{0}', space=sflag, size = 0x8, scoped, tag = 'scoped memory for tpu_custom_call.1']
    #allocation7 [shape = 'u8[512]{0}', space=smem, size = 0x200, scoped, tag = 'input window, operand 1, single buffered']
    #allocation8 [shape = 'u8[512]{0}', space=smem, size = 0x200, scoped, tag = 'input window, operand 2, single buffered']
    #allocation9 [shape = 's32[1]{0}', space=sflag, size = 0x4, scoped, tag = 'scoped memory for tpu_custom_call.1']
    #allocation10 [shape = 'u8[512]{0}', space=smem, size = 0x200, scoped, tag = 'input window, operand 3, single buffered']
    #allocation11 [shape = 'u8[1024]{0}', space=vmem, size = 0x400, scoped, tag = 'output window, operand 0']
    %11 = vsyncpa [#allocation4], 0
    %s12 = scalar_lea.sflag [#allocation4], 1
    %13 = vsyncpa %s12, 0
    %14 = vsyncpa [#allocation6], 0
    %15 = vsyncpa [#allocation9], 0
    %16 = vsyncpa [#allocation5], 0
    %s17 = scalar_lea.sflag [#allocation5], 1
    %18 = vsyncpa %s17, 0
    loop: start=0, step=1, limit=5
    $region2: #{tpu_custom_call.1} parent=1 // loop_pre_header
      _
    $region3: #{tpu_custom_call.1} parent=1 // loop_header
      %s20 = sphi 0, %s24
      %p21 = scmp.ge.s32.totalorder %s20, 5
      %s30 = sphi 0, %s32
      %s33 = sphi 0, %s30
      %s34 = sphi 0, %s33
      %s50 = sphi 0, %s34
      %s54 = sphi 0, %s54
      %s56 = sphi 0, %s54
      %s57 = sphi 0, %s56
      %s71 = sphi 0, %s57
      %s75 = sphi 0, %s75
      %s77 = sphi 0, %s75
      %s78 = sphi 0, %s77
      %s92 = sphi 0, %s78
      %s96 = sphi 0, %s96
      %s98 = sphi 0, %s96
      %s99 = sphi 0, %s98
      %s113 = sphi 0, %s99
      %s117 = sphi 0, %s117
      %s119 = sphi 0, %s117
      %s120 = sphi 0, %s119
      %s134 = sphi 0, %s120
      %s140 = sphi 0, %s142
      %s143 = sphi 0, %s140
      %s144 = sphi 0, %s143
      %s160 = sphi 0, %s144
    $region4: #{tpu_custom_call.1} parent=1 // loop_header_branch
      %23 = sbr.rel (%p21) target = $region8
    $region5: #{tpu_custom_call.1} parent=1 // loop_body
      %s25 = ssub.s32 %s20, 1
      %s26 = ssub.s32 %s20, 2
      %s27 = sadd.s32 %s20, 1
      %s28 = ssub.s32 %s20, %s27
      %p29 = scmp.eq.s32.totalorder %s28, 0
      %s31 = sadd.s32 %s30, 1
      %s32 = scalar_select %p29, %s30, %s31
      %p35 = pneg %p29
      %p36 = scmp.eq.s32.totalorder %s20, 2
      %p37 = por %p35, %p36
      %p38 = scmp.ne.s32.totalorder %s30, %s33
      %p39 = scmp.eq.s32.totalorder %s20, 0
      %p40 = por %p38, %p39
      %p41 = scmp.ne.s32.totalorder %s30, %s33
      %p42 = scmp.eq.s32.totalorder %s25, 2
      %p43 = por %p41, %p42
      %p44 = scmp.ne.s32.totalorder %s33, %s34
      %p45 = scmp.eq.s32.totalorder %s25, 0
      %p46 = por %p44, %p45
      %p47 = scmp.ne.s32.totalorder %s33, %s34
      %p48 = scmp.eq.s32.totalorder %s26, 2
      %p49 = por %p47, %p48
      %p51 = scmp.ne.s32.totalorder %s34, %s50
      %p52 = scmp.eq.s32.totalorder %s26, 0
      %p53 = por %p51, %p52
      %s55 = sadd.s32 %s54, 1
      %p58 = scmp.eq.s32.totalorder %s20, 2
      %p59 = scmp.ne.s32.totalorder %s54, %s56
      %p60 = scmp.eq.s32.totalorder %s20, 0
      %p61 = por %p59, %p60
      %p62 = scmp.ne.s32.totalorder %s54, %s56
      %p63 = scmp.eq.s32.totalorder %s25, 2
      %p64 = por %p62, %p63
      %p65 = scmp.ne.s32.totalorder %s56, %s57
      %p66 = scmp.eq.s32.totalorder %s25, 0
      %p67 = por %p65, %p66
      %p68 = scmp.ne.s32.totalorder %s56, %s57
      %p69 = scmp.eq.s32.totalorder %s26, 2
      %p70 = por %p68, %p69
      %p72 = scmp.ne.s32.totalorder %s57, %s71
      %p73 = scmp.eq.s32.totalorder %s26, 0
      %p74 = por %p72, %p73
      %s76 = sadd.s32 %s75, 1
      %p79 = scmp.eq.s32.totalorder %s20, 2
      %p80 = scmp.ne.s32.totalorder %s75, %s77
      %p81 = scmp.eq.s32.totalorder %s20, 0
      %p82 = por %p80, %p81
      %p83 = scmp.ne.s32.totalorder %s75, %s77
      %p84 = scmp.eq.s32.totalorder %s25, 2
      %p85 = por %p83, %p84
      %p86 = scmp.ne.s32.totalorder %s77, %s78
      %p87 = scmp.eq.s32.totalorder %s25, 0
      %p88 = por %p86, %p87
      %p89 = scmp.ne.s32.totalorder %s77, %s78
      %p90 = scmp.eq.s32.totalorder %s26, 2
      %p91 = por %p89, %p90
      %p93 = scmp.ne.s32.totalorder %s78, %s92
      %p94 = scmp.eq.s32.totalorder %s26, 0
      %p95 = por %p93, %p94
      %s97 = sadd.s32 %s96, 1
      %p100 = scmp.eq.s32.totalorder %s20, 2
      %p101 = scmp.ne.s32.totalorder %s96, %s98
      %p102 = scmp.eq.s32.totalorder %s20, 0
      %p103 = por %p101, %p102
      %p104 = scmp.ne.s32.totalorder %s96, %s98
      %p105 = scmp.eq.s32.totalorder %s25, 2
      %p106 = por %p104, %p105
      %p107 = scmp.ne.s32.totalorder %s98, %s99
      %p108 = scmp.eq.s32.totalorder %s25, 0
      %p109 = por %p107, %p108
      %p110 = scmp.ne.s32.totalorder %s98, %s99
      %p111 = scmp.eq.s32.totalorder %s26, 2
      %p112 = por %p110, %p111
      %p114 = scmp.ne.s32.totalorder %s99, %s113
      %p115 = scmp.eq.s32.totalorder %s26, 0
      %p116 = por %p114, %p115
      %s118 = sadd.s32 %s117, 1
      %p121 = scmp.eq.s32.totalorder %s20, 2
      %p122 = scmp.ne.s32.totalorder %s117, %s119
      %p123 = scmp.eq.s32.totalorder %s20, 0
      %p124 = por %p122, %p123
      %p125 = scmp.ne.s32.totalorder %s117, %s119
      %p126 = scmp.eq.s32.totalorder %s25, 2
      %p127 = por %p125, %p126
      %p128 = scmp.ne.s32.totalorder %s119, %s120
      %p129 = scmp.eq.s32.totalorder %s25, 0
      %p130 = por %p128, %p129
      %p131 = scmp.ne.s32.totalorder %s119, %s120
      %p132 = scmp.eq.s32.totalorder %s26, 2
      %p133 = por %p131, %p132
      %p135 = scmp.ne.s32.totalorder %s120, %s134
      %p136 = scmp.eq.s32.totalorder %s26, 0
      %p137 = por %p135, %p136
      %s138 = ssub.s32 %s20, %s27
      %p139 = scmp.eq.s32.totalorder %s138, 0
      %s141 = sadd.s32 %s140, 1
      %s142 = scalar_select %p139, %s140, %s141
      %p145 = pneg %p139
      %p146 = scmp.eq.s32.totalorder %s20, 2
      %p147 = por %p145, %p146
      %p148 = scmp.ne.s32.totalorder %s140, %s143
      %p149 = scmp.eq.s32.totalorder %s20, 0
      %p150 = por %p148, %p149
      %p151 = scmp.ne.s32.totalorder %s140, %s143
      %p152 = scmp.eq.s32.totalorder %s25, 2
      %p153 = por %p151, %p152
      %p154 = scmp.ne.s32.totalorder %s143, %s144
      %p155 = scmp.eq.s32.totalorder %s25, 0
      %p156 = por %p154, %p155
      %p157 = scmp.ne.s32.totalorder %s143, %s144
      %p158 = scmp.eq.s32.totalorder %s26, 2
      %p159 = por %p157, %p158
      %p161 = scmp.ne.s32.totalorder %s144, %s160
      %p162 = scmp.eq.s32.totalorder %s26, 0
      %p163 = por %p161, %p162
      %p164 = scmp.le.s32.totalorder 1, %s20
      %p165 = scmp.lt.s32.totalorder %s20, 4
      %p166 = pnand %p164, %p165
      %p167 = pneg %p166
      // Predicated region
      $region9: #{tpu_custom_call.1} parent=5 // pred_check
        _
      $region10: #{tpu_custom_call.1} parent=5 // pred_check_branch
        %169 = sbr.rel (%p166) target = $region12
      $region11: #{tpu_custom_call.1} parent=5 // pred_region
        %s170 = ssub.s32 %s20, 1
        // Predicated region
        $region13: #{tpu_custom_call.1} parent=11 // pred_check
          %p171 = pneg %p67
        $region14: #{tpu_custom_call.1} parent=11 // pred_check_branch
          %173 = sbr.rel (%p171) target = $region16
        $region15: #{tpu_custom_call.1} parent=11 // pred_region
          %s175 = ssub.s32 16, 16
          %176 = vsyncadd [#allocation6], %s175
          %s178 = sshll.u32 %s1, 4
          %s179 = int_to_ptr.vmem [resolvable:$true] %s178
          %181 = dma.vmem_to_smem %s179, 16, [#allocation7], [#allocation6]
        $region16: #{tpu_custom_call.1} parent=11 // pred_fallthru
          _
        // Predicated region
        $region17: #{tpu_custom_call.1} parent=11 // pred_check
          %p182 = pneg %p88
        $region18: #{tpu_custom_call.1} parent=11 // pred_check_branch
          %184 = sbr.rel (%p182) target = $region20
        $region19: #{tpu_custom_call.1} parent=11 // pred_region
          %s186 = ssub.s32 16, 16
          %187 = vsyncadd [#allocation9], %s186
          %s189 = sshll.u32 %s2, 4
          %s190 = int_to_ptr.vmem [resolvable:$true] %s189
          %192 = dma.vmem_to_smem %s190, 16, [#allocation8], [#allocation9]
        $region20: #{tpu_custom_call.1} parent=11 // pred_fallthru
          _
        // Predicated region
        $region21: #{tpu_custom_call.1} parent=11 // pred_check
          %p193 = pneg %p109
        $region22: #{tpu_custom_call.1} parent=11 // pred_check_branch
          %195 = sbr.rel (%p193) target = $region24
        $region23: #{tpu_custom_call.1} parent=11 // pred_region
          %s197 = ssub.s32 16, 16
          %198 = vsyncadd [#allocation9], %s197
          %s200 = sshll.u32 %s3, 4
          %s201 = int_to_ptr.vmem [resolvable:$true] %s200
          %203 = dma.vmem_to_smem %s201, 16, [#allocation10], [#allocation9]
        $region24: #{tpu_custom_call.1} parent=11 // pred_fallthru
          _
        // Predicated region
        $region25: #{tpu_custom_call.1} parent=11 // pred_check
          %p204 = pneg %p130
        $region26: #{tpu_custom_call.1} parent=11 // pred_check_branch
          %206 = sbr.rel (%p204) target = $region28
        $region27: #{tpu_custom_call.1} parent=11 // pred_region
          _
        $region28: #{tpu_custom_call.1} parent=11 // pred_fallthru
          _
      $region12: #{tpu_custom_call.1} parent=5 // pred_fallthru
        _
      %p207 = scmp.lt.s32.totalorder %s20, 3
      // Predicated region
      $region29: #{tpu_custom_call.1} parent=5 // pred_check
        %p208 = pneg %p207
      $region30: #{tpu_custom_call.1} parent=5 // pred_check_branch
        %210 = sbr.rel (%p208) target = $region32
      $region31: #{tpu_custom_call.1} parent=5 // pred_region
        // Predicated region
        $region33: #{tpu_custom_call.1} parent=31 // pred_check
          %p211 = pneg %p40
        $region34: #{tpu_custom_call.1} parent=31 // pred_check_branch
          %213 = sbr.rel (%p211) target = $region36
        $region35: #{tpu_custom_call.1} parent=31 // pred_region
          %s214 = sand.u32 %s30, 1
          %s215 = scalar_lea.sflag [#allocation4], %s214
          %s216 = sand.u32 %s30, 1
          %s217 = smul.addr %s216, 4
          %s218 = scalar_lea.vmem [#allocation3], %s217
          %s220 = ssub.s32 64, 64
          %221 = vsyncadd %s215, %s220
          %s222 = smul.addr %s20, 64
          %s223 = scalar_lea.hbm %s0, %s222
          %s225 = sshll.u32 %s218, 4
          %s226 = int_to_ptr.vmem [resolvable:$true] %s225
          %228 = dma.hbm_to_vmem [thread:$0]  %s223, 64, %s226, %s215
        $region36: #{tpu_custom_call.1} parent=31 // pred_fallthru
          _
      $region32: #{tpu_custom_call.1} parent=5 // pred_fallthru
        _
      %p229 = scmp.le.s32.totalorder 1, %s20
      %p230 = scmp.lt.s32.totalorder %s20, 4
      %p231 = pnand %p229, %p230
      %p232 = pneg %p231
      // Predicated region
      $region37: #{tpu_custom_call.1} parent=5 // pred_check
        _
      $region38: #{tpu_custom_call.1} parent=5 // pred_check_branch
        %234 = sbr.rel (%p231) target = $region40
      $region39: #{tpu_custom_call.1} parent=5 // pred_region
        %s235 = ssub.s32 %s20, 1
        %s236 = sand.u32 %s33, 1
        %s237 = scalar_lea.sflag [#allocation4], %s236
        %s238 = sand.u32 %s33, 1
        %s239 = smul.addr %s238, 4
        %s240 = scalar_lea.vmem [#allocation3], %s239
        // Predicated region
        $region41: #{tpu_custom_call.1} parent=39 // pred_check
          %p241 = pneg %p46
        $region42: #{tpu_custom_call.1} parent=39 // pred_check_branch
          %243 = sbr.rel (%p241) target = $region44
        $region43: #{tpu_custom_call.1} parent=39 // pred_region
          %244 = dma.done %s237, 64
        $region44: #{tpu_custom_call.1} parent=39 // pred_fallthru
          _
        // Predicated region
        $region45: #{tpu_custom_call.1} parent=39 // pred_check
          %p245 = pneg %p67
        $region46: #{tpu_custom_call.1} parent=39 // pred_check_branch
          %247 = sbr.rel (%p245) target = $region48
        $region47: #{tpu_custom_call.1} parent=39 // pred_region
          %248 = dma.done [#allocation6], 16
        $region48: #{tpu_custom_call.1} parent=39 // pred_fallthru
          _
        // Predicated region
        $region49: #{tpu_custom_call.1} parent=39 // pred_check
          %p249 = pneg %p88
        $region50: #{tpu_custom_call.1} parent=39 // pred_check_branch
          %251 = sbr.rel (%p249) target = $region52
        $region51: #{tpu_custom_call.1} parent=39 // pred_region
          %252 = dma.done [#allocation9], 16
        $region52: #{tpu_custom_call.1} parent=39 // pred_fallthru
          _
        // Predicated region
        $region53: #{tpu_custom_call.1} parent=39 // pred_check
          %p253 = pneg %p109
        $region54: #{tpu_custom_call.1} parent=39 // pred_check_branch
          %255 = sbr.rel (%p253) target = $region56
        $region55: #{tpu_custom_call.1} parent=39 // pred_region
          %256 = dma.done [#allocation9], 16
        $region56: #{tpu_custom_call.1} parent=39 // pred_fallthru
          _
        %257 = sfence
        %s258 = sand.u32 %s33, 1
        %s259 = scalar_lea.sflag [#allocation4], %s258
        %s260 = sand.u32 %s33, 1
        %s261 = smul.addr %s260, 4
        %s262 = scalar_lea.vmem [#allocation3], %s261
        %p263 = pneg %p46
        %p264 = pneg %p43
        %p265 = pneg %p67
        %p266 = pneg %p64
        %p267 = pneg %p88
        %p268 = pneg %p85
        %p269 = pneg %p109
        %p270 = pneg %p106
        %p271 = pneg %p130
        %p272 = pneg %p127
        %p273 = pneg %p156
        %p274 = pneg %p153
        %s275 = sand.u32 %s143, 1
        %s276 = scalar_lea.sflag [#allocation5], %s275
        %s277 = sand.u32 %s143, 1
        %s278 = scalar_lea.vmem [#allocation11], %s277
        %v279 = vld [vmem:[%s240] sm:$0x7]
        %s280 = sld [smem:[#allocation2]]
        %v281 = vstv %s280
        %s282 = sld [smem:[#allocation7]]
        %v283 = vstv %s282
        %v284 = vmul.f32 %v279, %v283
        %s285 = sld [smem:[#allocation7 + $0xa]]
        %v286 = vstv %s285
        %v287 = vmul.f32 %v279, %v286
        %v289 = vrot.slane %v287, 1
        %v291 = vadd.f32 %v284, %v289
        %s292 = sld [smem:[#allocation7 + $0x14]]
        %v293 = vstv %s292
        %v294 = vmul.f32 %v279, %v293
        %v296 = vrot.slane %v294, 2
        %v298 = vadd.f32 %v291, %v296
        %s299 = sld [smem:[#allocation8]]
        %v300 = vstv %s299
        %v301 = vadd.f32 %v298, %v300
        %v302 = vtanh.pop %v301
        %s303 = sld [smem:[#allocation10]]
        %v304 = vstv %s303
        %v305 = vmul.f32 %v302, %v304
        %v306 = vadd.f32 %v281, %v305
        %s307 = sld [smem:[#allocation7 + $0x1]]
        %v308 = vstv %s307
        %v309 = vmul.f32 %v279, %v308
        %s310 = sld [smem:[#allocation7 + $0xb]]
        %v311 = vstv %s310
        %v312 = vmul.f32 %v279, %v311
        %v314 = vrot.slane %v312, 1
        %v316 = vadd.f32 %v309, %v314
        %s317 = sld [smem:[#allocation7 + $0x15]]
        %v318 = vstv %s317
        %v319 = vmul.f32 %v279, %v318
        %v321 = vrot.slane %v319, 2
        %v323 = vadd.f32 %v316, %v321
        %s324 = sld [smem:[#allocation8 + $0x1]]
        %v325 = vstv %s324
        %v326 = vadd.f32 %v323, %v325
        %v327 = vtanh.pop %v326
        %s328 = sld [smem:[#allocation10 + $0x1]]
        %v329 = vstv %s328
        %v330 = vmul.f32 %v327, %v329
        %v331 = vadd.f32 %v306, %v330
        %s332 = sld [smem:[#allocation7 + $0x2]]
        %v333 = vstv %s332
        %v334 = vmul.f32 %v279, %v333
        %s335 = sld [smem:[#allocation7 + $0xc]]
        %v336 = vstv %s335
        %v337 = vmul.f32 %v279, %v336
        %v339 = vrot.slane %v337, 1
        %v341 = vadd.f32 %v334, %v339
        %s342 = sld [smem:[#allocation7 + $0x16]]
        %v343 = vstv %s342
        %v344 = vmul.f32 %v279, %v343
        %v346 = vrot.slane %v344, 2
        %v348 = vadd.f32 %v341, %v346
        %s349 = sld [smem:[#allocation8 + $0x2]]
        %v350 = vstv %s349
        %v351 = vadd.f32 %v348, %v350
        %v352 = vtanh.pop %v351
        %s353 = sld [smem:[#allocation10 + $0x2]]
        %v354 = vstv %s353
        %v355 = vmul.f32 %v352, %v354
        %v356 = vadd.f32 %v331, %v355
        %s357 = sld [smem:[#allocation7 + $0x3]]
        %v358 = vstv %s357
        %v359 = vmul.f32 %v279, %v358
        %s360 = sld [smem:[#allocation7 + $0xd]]
        %v361 = vstv %s360
        %v362 = vmul.f32 %v279, %v361
        %v364 = vrot.slane %v362, 1
        %v366 = vadd.f32 %v359, %v364
        %s367 = sld [smem:[#allocation7 + $0x17]]
        %v368 = vstv %s367
        %v369 = vmul.f32 %v279, %v368
        %v371 = vrot.slane %v369, 2
        %v373 = vadd.f32 %v366, %v371
        %s374 = sld [smem:[#allocation8 + $0x3]]
        %v375 = vstv %s374
        %v376 = vadd.f32 %v373, %v375
        %v377 = vtanh.pop %v376
        %s378 = sld [smem:[#allocation10 + $0x3]]
        %v379 = vstv %s378
        %v380 = vmul.f32 %v377, %v379
        %v381 = vadd.f32 %v356, %v380
        %s382 = sld [smem:[#allocation7 + $0x4]]
        %v383 = vstv %s382
        %v384 = vmul.f32 %v279, %v383
        %s385 = sld [smem:[#allocation7 + $0xe]]
        %v386 = vstv %s385
        %v387 = vmul.f32 %v279, %v386
        %v389 = vrot.slane %v387, 1
        %v391 = vadd.f32 %v384, %v389
        %s392 = sld [smem:[#allocation7 + $0x18]]
        %v393 = vstv %s392
        %v394 = vmul.f32 %v279, %v393
        %v396 = vrot.slane %v394, 2
        %v398 = vadd.f32 %v391, %v396
        %s399 = sld [smem:[#allocation8 + $0x4]]
        %v400 = vstv %s399
        %v401 = vadd.f32 %v398, %v400
        %v402 = vtanh.pop %v401
        %s403 = sld [smem:[#allocation10 + $0x4]]
        %v404 = vstv %s403
        %v405 = vmul.f32 %v402, %v404
        %v406 = vadd.f32 %v381, %v405
        %s407 = sld [smem:[#allocation7 + $0x5]]
        %v408 = vstv %s407
        %v409 = vmul.f32 %v279, %v408
        %s410 = sld [smem:[#allocation7 + $0xf]]
        %v411 = vstv %s410
        %v412 = vmul.f32 %v279, %v411
        %v414 = vrot.slane %v412, 1
        %v416 = vadd.f32 %v409, %v414
        %s417 = sld [smem:[#allocation7 + $0x19]]
        %v418 = vstv %s417
        %v419 = vmul.f32 %v279, %v418
        %v421 = vrot.slane %v419, 2
        %v423 = vadd.f32 %v416, %v421
        %s424 = sld [smem:[#allocation8 + $0x5]]
        %v425 = vstv %s424
        %v426 = vadd.f32 %v423, %v425
        %v427 = vtanh.pop %v426
        %s428 = sld [smem:[#allocation10 + $0x5]]
        %v429 = vstv %s428
        %v430 = vmul.f32 %v427, %v429
        %v431 = vadd.f32 %v406, %v430
        %s432 = sld [smem:[#allocation7 + $0x6]]
        %v433 = vstv %s432
        %v434 = vmul.f32 %v279, %v433
        %s435 = sld [smem:[#allocation7 + $0x10]]
        %v436 = vstv %s435
        %v437 = vmul.f32 %v279, %v436
        %v439 = vrot.slane %v437, 1
        %v441 = vadd.f32 %v434, %v439
        %s442 = sld [smem:[#allocation7 + $0x1a]]
        %v443 = vstv %s442
        %v444 = vmul.f32 %v279, %v443
        %v446 = vrot.slane %v444, 2
        %v448 = vadd.f32 %v441, %v446
        %s449 = sld [smem:[#allocation8 + $0x6]]
        %v450 = vstv %s449
        %v451 = vadd.f32 %v448, %v450
        %v452 = vtanh.pop %v451
        %s453 = sld [smem:[#allocation10 + $0x6]]
        %v454 = vstv %s453
        %v455 = vmul.f32 %v452, %v454
        %v456 = vadd.f32 %v431, %v455
        %s457 = sld [smem:[#allocation7 + $0x7]]
        %v458 = vstv %s457
        %v459 = vmul.f32 %v279, %v458
        %s460 = sld [smem:[#allocation7 + $0x11]]
        %v461 = vstv %s460
        %v462 = vmul.f32 %v279, %v461
        %v464 = vrot.slane %v462, 1
        %v466 = vadd.f32 %v459, %v464
        %s467 = sld [smem:[#allocation7 + $0x1b]]
        %v468 = vstv %s467
        %v469 = vmul.f32 %v279, %v468
        %v471 = vrot.slane %v469, 2
        %v473 = vadd.f32 %v466, %v471
        %s474 = sld [smem:[#allocation8 + $0x7]]
        %v475 = vstv %s474
        %v476 = vadd.f32 %v473, %v475
        %v477 = vtanh.pop %v476
        %s478 = sld [smem:[#allocation10 + $0x7]]
        %v479 = vstv %s478
        %v480 = vmul.f32 %v477, %v479
        %v481 = vadd.f32 %v456, %v480
        %s482 = sld [smem:[#allocation7 + $0x8]]
        %v483 = vstv %s482
        %v484 = vmul.f32 %v279, %v483
        %s485 = sld [smem:[#allocation7 + $0x12]]
        %v486 = vstv %s485
        %v487 = vmul.f32 %v279, %v486
        %v489 = vrot.slane %v487, 1
        %v491 = vadd.f32 %v484, %v489
        %s492 = sld [smem:[#allocation7 + $0x1c]]
        %v493 = vstv %s492
        %v494 = vmul.f32 %v279, %v493
        %v496 = vrot.slane %v494, 2
        %v498 = vadd.f32 %v491, %v496
        %s499 = sld [smem:[#allocation8 + $0x8]]
        %v500 = vstv %s499
        %v501 = vadd.f32 %v498, %v500
        %v502 = vtanh.pop %v501
        %s503 = sld [smem:[#allocation10 + $0x8]]
        %v504 = vstv %s503
        %v505 = vmul.f32 %v502, %v504
        %v506 = vadd.f32 %v481, %v505
        %s507 = sld [smem:[#allocation7 + $0x9]]
        %v508 = vstv %s507
        %v509 = vmul.f32 %v279, %v508
        %s510 = sld [smem:[#allocation7 + $0x13]]
        %v511 = vstv %s510
        %v512 = vmul.f32 %v279, %v511
        %v514 = vrot.slane %v512, 1
        %v516 = vadd.f32 %v509, %v514
        %s517 = sld [smem:[#allocation7 + $0x1d]]
        %v518 = vstv %s517
        %v519 = vmul.f32 %v279, %v518
        %v521 = vrot.slane %v519, 2
        %v523 = vadd.f32 %v516, %v521
        %s524 = sld [smem:[#allocation8 + $0x9]]
        %v525 = vstv %s524
        %v526 = vadd.f32 %v523, %v525
        %v527 = vtanh.pop %v526
        %s528 = sld [smem:[#allocation10 + $0x9]]
        %v529 = vstv %s528
        %v530 = vmul.f32 %v527, %v529
        %v531 = vadd.f32 %v506, %v530
        %532 = vst [vmem:[%s278] sm:$0x1] %v531
        %s533 = sand.u32 %s143, 1
        %s534 = scalar_lea.sflag [#allocation5], %s533
        %s535 = sand.u32 %s143, 1
        %s536 = scalar_lea.vmem [#allocation11], %s535
        // Predicated region
        $region57: #{tpu_custom_call.1} parent=39 // pred_check
          %p537 = pneg %p153
        $region58: #{tpu_custom_call.1} parent=39 // pred_check_branch
          %539 = sbr.rel (%p537) target = $region60
        $region59: #{tpu_custom_call.1} parent=39 // pred_region
          %s541 = ssub.s32 16, 16
          %542 = vsyncadd %s534, %s541
          %s543 = smul.addr %s25, 16
          %s544 = scalar_lea.hbm %s5, %s543
          %s546 = sshll.u32 %s536, 4
          %s547 = int_to_ptr.vmem [resolvable:$true] %s546
          %549 = dma.vmem_to_hbm [thread:$0]  %s547, 16, %s544, %s534
        $region60: #{tpu_custom_call.1} parent=39 // pred_fallthru
          _
      $region40: #{tpu_custom_call.1} parent=5 // pred_fallthru
        _
      %p550 = scmp.le.s32.totalorder 2, %s20
      // Predicated region
      $region61: #{tpu_custom_call.1} parent=5 // pred_check
        %p551 = pneg %p550
      $region62: #{tpu_custom_call.1} parent=5 // pred_check_branch
        %553 = sbr.rel (%p551) target = $region64
      $region63: #{tpu_custom_call.1} parent=5 // pred_region
        %s554 = ssub.s32 %s20, 2
        // Predicated region
        $region65: #{tpu_custom_call.1} parent=63 // pred_check
          %p555 = pneg %p159
        $region66: #{tpu_custom_call.1} parent=63 // pred_check_branch
          %557 = sbr.rel (%p555) target = $region68
        $region67: #{tpu_custom_call.1} parent=63 // pred_region
          %s558 = sand.u32 %s144, 1
          %s559 = scalar_lea.sflag [#allocation5], %s558
          %s560 = sand.u32 %s144, 1
          %s561 = scalar_lea.vmem [#allocation11], %s560
          %562 = dma.done %s559, 16
        $region68: #{tpu_custom_call.1} parent=63 // pred_fallthru
          _
      $region64: #{tpu_custom_call.1} parent=5 // pred_fallthru
        _
    $region6: #{tpu_custom_call.1} parent=1 // loop_footer
      %s24 = sadd.s32 1, %s20
    $region7: #{tpu_custom_call.1} parent=1 // loop_footer_branch
      %19 = sbr.rel target = $region3
    $region8: #{tpu_custom_call.1} parent=1 // loop_exit
      _
    %563 = vsyncpa [#allocation4], 1
    %s564 = scalar_lea.sflag [#allocation4], 1
    %565 = vsyncpa %s564, 1
    %566 = vsyncpa [#allocation5], 1
    %s567 = scalar_lea.sflag [#allocation5], 1
    %568 = vsyncpa %s567, 1
    %569 = vsyncpa [#allocation6], 1
    %s570 = scalar_lea.sflag [#allocation6], 1
    %571 = vsyncpa %s570, 1
    %572 = vsyncpa [#allocation9], 1

</llo_original>
